<compile_context>
chip_gen: v6e
topology: v6e:2x2x1
jax: 0.10.0
libtpu: 0.0.40
codegen_flags: <defaults>
</compile_context>

<pallas_src>
import functools

import jax
import jax.numpy as jnp
from jax.experimental import pallas as pl
from jax.experimental.pallas import tpu as pltpu

NEG_INF = -1e30
# Explicit scoped-VMEM budget (defaults are only 16/32 MiB). 56 MiB is below
# physical VMEM on every generation (128 MiB v5e/v6e, 64 MiB v7x).
VMEM_LIMIT_BYTES = 56 * 1024 * 1024


def _invariant_spec(shape, index_map):
    """BlockSpec for a grid-invariant operand: single-buffer it (saves VMEM)."""
    try:
        return pl.BlockSpec(shape, index_map, pipeline_mode=pl.Buffered(1))
    except Exception:  # jax build without pipeline_mode/Buffered -> default
        return pl.BlockSpec(shape, index_map)


# ---------------------------------------------------------------------------
# Kernel 1: fused multi-head projection + attention logits
#   Z  = X @ W_all            (N, H*F)  bf16   (heads packed along lanes)
#   el = al_pack @ Z^T        (H, N)    f32    (source-side logits, src on lanes)
#   er = Z @ ar_pack^T        (N, H)    f32    (destination-side logits)
# ---------------------------------------------------------------------------
def _proj_kernel(x_ref, w_ref, al_ref, ar_ref, z_ref, el_ref, er_ref):
    x = x_ref[...].astype(jnp.bfloat16)                    # MXU-native operands
    w = w_ref[...]                                         # bf16 (pre-cast)
    z = jnp.dot(x, w, preferred_element_type=jnp.float32)  # (tn, H*F) f32 acc
    z_bf = z.astype(jnp.bfloat16)
    z_ref[...] = z_bf
    # el[h, n] = sum_k al_pack[h, k] * z[n, k]   -> (H, tn), src on lanes
    el_ref[...] = jax.lax.dot_general(
        al_ref[...], z_bf, (((1,), (1,)), ((), ())),
        preferred_element_type=jnp.float32)
    # er[n, h] = sum_k z[n, k] * ar_pack[h, k]   -> (tn, H)
    er_ref[...] = jax.lax.dot_general(
        z_bf, ar_ref[...], (((1,), (1,)), ((), ())),
        preferred_element_type=jnp.float32)


def gat_project(x, w_all, al_pack, ar_pack, *, tile_n):
    n_pad, d_in = x.shape
    num_heads, hf = al_pack.shape
    assert n_pad % tile_n == 0
    return pl.pallas_call(
        _proj_kernel,
        out_shape=(
            jax.ShapeDtypeStruct((n_pad, hf), jnp.bfloat16),      # Z
            jax.ShapeDtypeStruct((num_heads, n_pad), jnp.float32),  # el
            jax.ShapeDtypeStruct((n_pad, num_heads), jnp.float32),  # er
        ),
        grid_spec=pltpu.PrefetchScalarGridSpec(
            num_scalar_prefetch=0,
            grid=(n_pad // tile_n,),
            in_specs=[
                pl.BlockSpec((tile_n, d_in), lambda i: (i, 0)),
                _invariant_spec((d_in, hf), lambda i: (0, 0)),
                _invariant_spec((num_heads, hf), lambda i: (0, 0)),
                _invariant_spec((num_heads, hf), lambda i: (0, 0)),
            ],
            out_specs=(
                pl.BlockSpec((tile_n, hf), lambda i: (i, 0)),
                pl.BlockSpec((num_heads, tile_n), lambda i: (0, i)),
                pl.BlockSpec((tile_n, num_heads), lambda i: (i, 0)),
            ),
        ),
        compiler_params=pltpu.CompilerParams(
            dimension_semantics=("parallel",),
            vmem_limit_bytes=VMEM_LIMIT_BYTES),
    )(x, w_all, al_pack, ar_pack)


# ---------------------------------------------------------------------------
# Kernel 2: edge softmax + aggregation with online (flash-style) softmax over
#           source blocks, fused bias + ReLU (+ final row softmax) epilogue.
#   grid = (dst tiles [parallel], src tiles [arbitrary])
# ---------------------------------------------------------------------------
def _gat_attn_kernel(adj_ref, z_ref, el_ref, er_ref, b_ref, out_ref,
                     m_sc, l_sc, acc_sc, *, num_heads, feat_out, apply_softmax):
    j = pl.program_id(1)
    nj = pl.num_programs(1)

    @pl.when(j == 0)
    def _init():
        m_sc[...] = jnp.full_like(m_sc, NEG_INF)
        l_sc[...] = jnp.zeros_like(l_sc)
        acc_sc[...] = jnp.zeros_like(acc_sc)

    # Additive edge mask shared by all heads: 0 where edge, -1e30 where not.
    neg_bias = (adj_ref[...].astype(jnp.float32) - 1.0) * -NEG_INF * -1.0
    neg_bias = (adj_ref[...].astype(jnp.float32) - 1.0) * (-NEG_INF) * (-1.0)  # == (adj-1)*1e30*-1
    neg_bias = (adj_ref[...].astype(jnp.float32) - 1.0) * 1e30                 # 0 / -1e30

    z_blk = z_ref[...]                                     # (TS, H*F) bf16
    el = el_ref[...]                                       # (H, TS)  f32
    er = er_ref[...]                                       # (TN, H)  f32

    for h in range(num_heads):
        f0, f1 = h * feat_out, (h + 1) * feat_out
        # e[dst, src] = leaky_relu(er[dst] + el[src], 0.2) masked to -1e30
        e = er[:, h:h + 1] + el[h:h + 1, :]                # (TN, TS)
        e = jnp.maximum(e, 0.2 * e) + neg_bias
        m_old = m_sc[:, h:h + 1]                           # (TN, 1)
        m_new = jnp.maximum(m_old, jnp.max(e, axis=-1, keepdims=True))
        scale = jnp.exp(m_old - m_new)
        # masked entries underflow to exactly 0 once the row max is finite
        # (guaranteed by self-loops); early all-masked blocks are wiped later
        # by scale = exp(-1e30 - finite) == 0.
        p = jnp.exp(e - m_new)                             # (TN, TS)
        l_sc[:, h:h + 1] = scale * l_sc[:, h:h + 1] + jnp.sum(
            p, axis=-1, keepdims=True)
        # TODO(synk): pack heads into one block-diagonal RHS so the aggregation
        # matmul sees >=128 output lanes on the 256-wide v6e/v7x MXU.
        pz = jnp.dot(p.astype(jnp.bfloat16), z_blk[:, f0:f1],
                     preferred_element_type=jnp.float32)   # (TN, F)
        acc_sc[:, f0:f1] = scale * acc_sc[:, f0:f1] + pz
        m_sc[:, h:h + 1] = m_new

    @pl.when(j == nj - 1)
    def _finalize():
        inv_l = pl.reciprocal(jnp.maximum(l_sc[...], 1e-20), approx=True)
        for h in range(num_heads):
            f0, f1 = h * feat_out, (h + 1) * feat_out
            acc_sc[:, f0:f1] = acc_sc[:, f0:f1] * inv_l[:, h:h + 1]
        rst = jnp.maximum(acc_sc[...] + b_ref[...], 0.0)   # bias + trailing ReLU
        if apply_softmax:                                  # fused final softmax
            mm = jnp.max(rst, axis=-1, keepdims=True)
            ex = jnp.exp(rst - mm)
            rst = ex * pl.reciprocal(jnp.sum(ex, axis=-1, keepdims=True),
                                     approx=True)
        out_ref[...] = rst.astype(out_ref.dtype)


def gat_conv_layer(x, adj_i8, w, attn_l, attn_r, bias, *,
                   apply_softmax=False, tile_dst=128, tile_src=128):
    """One GATConv layer + view(-1, H*F) + ReLU (+ optional final softmax).

    For large graphs raise tile_dst/tile_src (256-512 on v5e/v6e, ~128-256 on
    v7x's 64 MiB VMEM); the demo keeps 128 so the 2x2 grid exercises both axes.
    """
    num_heads, d_in, feat_out = w.shape
    n_pad = x.shape[0]
    hf = num_heads * feat_out
    tn = min(tile_dst, n_pad)
    ts = min(tile_src, n_pad)
    assert n_pad % tn == 0 and n_pad % ts == 0

    # Re-pack head-major params into lane-dense layouts (tiny, per call).
    w_all = jnp.transpose(w, (1, 0, 2)).reshape(d_in, hf).astype(jnp.bfloat16)
    eye_h = jnp.eye(num_heads, dtype=jnp.float32)
    al_pack = (eye_h[:, :, None] * attn_l).reshape(num_heads, hf).astype(jnp.bfloat16)
    ar_pack = (eye_h[:, :, None] * attn_r).reshape(num_heads, hf).astype(jnp.bfloat16)
    b_full = bias.reshape(1, hf).astype(jnp.float32)

    z, el, er = gat_project(x, w_all, al_pack, ar_pack, tile_n=tn)

    out_dtype = jnp.float32 if apply_softmax else jnp.bfloat16
    kernel = functools.partial(_gat_attn_kernel, num_heads=num_heads,
                               feat_out=feat_out, apply_softmax=apply_softmax)
    return pl.pallas_call(
        kernel,
        out_shape=jax.ShapeDtypeStruct((n_pad, hf), out_dtype),
        grid_spec=pltpu.PrefetchScalarGridSpec(
            num_scalar_prefetch=0,
            grid=(n_pad // tn, n_pad // ts),
            in_specs=[
                pl.BlockSpec((tn, ts), lambda i, j: (i, j)),          # adj int8
                pl.BlockSpec((ts, hf), lambda i, j: (j, 0)),          # Z src tile
                pl.BlockSpec((num_heads, ts), lambda i, j: (0, j)),   # el src tile
                pl.BlockSpec((tn, num_heads), lambda i, j: (i, 0)),   # er dst tile
                _invariant_spec((1, hf), lambda i, j: (0, 0)),        # bias
            ],
            out_specs=pl.BlockSpec((tn, hf), lambda i, j: (i, 0)),
            scratch_shapes=[
                pltpu.VMEM((tn, num_heads), jnp.float32),   # running max
                pltpu.VMEM((tn, num_heads), jnp.float32),   # running denom
                pltpu.VMEM((tn, hf), jnp.float32),          # running numerator
            ],
        ),
        compiler_params=pltpu.CompilerParams(
            dimension_semantics=("parallel", "arbitrary"),
            vmem_limit_bytes=VMEM_LIMIT_BYTES),
    )(adj_i8, z, el, er, b_full)


# ---------------------------------------------------------------------------
# Parameters / forward pass
# ---------------------------------------------------------------------------
def init_gatconv_params(key, in_feats, out_feats, num_heads):
    k1, k2, k3, k4 = jax.random.split(key, 4)
    scale = 0.1
    return dict(
        w=scale * jax.random.normal(k1, (num_heads, in_feats, out_feats), jnp.float32),
        al=scale * jax.random.normal(k2, (num_heads, 1, out_feats), jnp.float32),
        ar=scale * jax.random.normal(k3, (num_heads, 1, out_feats), jnp.float32),
        b=scale * jax.random.normal(k4, (num_heads, 1, out_feats), jnp.float32),
    )


def build_gat_params(key, in_feats, hid_feat, out_feats, num_heads, num_hlayers=0):
    keys = jax.random.split(key, num_hlayers + 2)
    params = [init_gatconv_params(keys[0], in_feats, hid_feat, num_heads)]
    for i in range(num_hlayers):
        params.append(init_gatconv_params(keys[1 + i], hid_feat * num_heads,
                                          hid_feat, num_heads))
    params.append(init_gatconv_params(keys[-1], hid_feat * num_heads, out_feats, 1))
    return params


def gat_forward(adj, in_feat, params, *, tile_n=128):
    """adj[dst, src] in {0,1} (self-loops assumed), in_feat (N, Din)."""
    n = in_feat.shape[0]
    n_pad = max(tile_n, ((n + tile_n - 1) // tile_n) * tile_n)
    pad = n_pad - n
    adj_i8 = jnp.pad(adj.astype(jnp.int8), ((0, pad), (0, pad)))   # O(N^2) term in int8
    h = jnp.pad(in_feat.astype(jnp.float32), ((0, pad), (0, 0)))
    last = len(params) - 1
    for i, layer in enumerate(params):
        h = gat_conv_layer(h, adj_i8, layer["w"], layer["al"], layer["ar"],
                           layer["b"], apply_softmax=(i == last),
                           tile_dst=tile_n, tile_src=tile_n)
    # h.squeeze() of the module is a no-op here (N > 1, out_feats > 1)
    return h[:n]


def gat_forward_ref(adj, x, params):
    """Pure-JAX (f32) reference of the same module, for correctness check."""
    h = x
    for layer in params:
        num_heads = layer["w"].shape[0]
        feat_out = layer["w"].shape[2]
        z = jnp.einsum("nd,hdf->hnf", h, layer["w"])              # (H, N, F)
        el = jnp.sum(z * layer["al"], axis=-1)                    # (H, N) src
        er = jnp.sum(z * layer["ar"], axis=-1)                    # (H, N) dst
        e = er[:, :, None] + el[:, None, :]                       # (H, dst, src)
        e = jnp.where(e > 0, e, 0.2 * e)
        mask = adj[None] > 0
        e = jnp.where(mask, e, NEG_INF)
        e = e - jnp.max(e, axis=-1, keepdims=True)
        p = jnp.where(mask, jnp.exp(e), 0.0)
        alpha = p / jnp.sum(p, axis=-1, keepdims=True)
        rst = jnp.einsum("hds,hsf->hdf", alpha, z) + layer["b"]   # (H, N, F)
        h = jnp.maximum(
            jnp.transpose(rst, (1, 0, 2)).reshape(h.shape[0], num_heads * feat_out),
            0.0)
    return jax.nn.softmax(h, axis=1)


if __name__ == "__main__":
    key = jax.random.PRNGKey(0)
    k_feat, k_param = jax.random.split(key)

    # Small graph: 250 nodes (not a tile multiple -> exercises padding),
    # bidirectional ring + self-loops.
    N = 250
    in_feats, hid_feat, out_feats, num_heads, num_hlayers = 16, 16, 8, 4, 1

    eye = jnp.eye(N, dtype=jnp.float32)
    ring_fwd = jnp.roll(eye, 1, axis=1)
    ring_bwd = jnp.roll(eye, -1, axis=1)
    adj = jnp.clip(eye + ring_fwd + ring_bwd, 0.0, 1.0)     # adj[dst, src]

    x = jax.random.normal(k_feat, (N, in_feats), jnp.float32)
    params = build_gat_params(k_param, in_feats, hid_feat, out_feats,
                              num_heads, num_hlayers)

    out = gat_forward(adj, x, params, tile_n=128)            # 2x2 grid per layer
    out = jax.block_until_ready(out)

    ref = gat_forward_ref(adj, x, params)

    assert out.shape == (N, out_feats)
    assert bool(jnp.all(jnp.isfinite(out)))
    # softmax rows sum to ~1 (approx reciprocal => loose tolerance)
    assert bool(jnp.allclose(jnp.sum(out, axis=1), 1.0, atol=1e-2))
    # matches the f32 reference up to bf16 / approx-reciprocal error
    assert bool(jnp.allclose(out, ref, atol=5e-2))
    print("KERNEL_OK")
</pallas_src>

<mosaic_0001>
module attributes {stable_mosaic.version = 11 : i64} {
  func.func @_proj_kernel(%arg0: i32, %arg1: memref<128x16xf32, #tpu.memory_space<vmem>>, %arg2: memref<16x64xbf16, #tpu.memory_space<vmem>>, %arg3: memref<4x64xbf16, #tpu.memory_space<vmem>>, %arg4: memref<4x64xbf16, #tpu.memory_space<vmem>>, %arg5: memref<128x64xbf16, #tpu.memory_space<vmem>>, %arg6: memref<4x128xf32, #tpu.memory_space<vmem>>, %arg7: memref<128x4xf32, #tpu.memory_space<vmem>>) attributes {dimension_semantics = [#tpu.dimension_semantics<parallel>], iteration_bounds = array<i64: 2>, scalar_prefetch = 0 : i64, scratch_operands = 0 : i64, tpu.core_type = #tpu.core_type<tc>, window_params = [{transform_indices = @transform_0, window_bounds = array<i64: 128, 16>}, {pipeline_mode = #tpu.pipeline_mode<synchronous>, transform_indices = @transform_1, window_bounds = array<i64: 16, 64>}, {pipeline_mode = #tpu.pipeline_mode<synchronous>, transform_indices = @transform_2, window_bounds = array<i64: 4, 64>}, {pipeline_mode = #tpu.pipeline_mode<synchronous>, transform_indices = @transform_3, window_bounds = array<i64: 4, 64>}, {transform_indices = @transform_4, window_bounds = array<i64: 128, 64>}, {transform_indices = @transform_5, window_bounds = array<i64: 4, 128>}, {transform_indices = @transform_6, window_bounds = array<i64: 128, 4>}]} {
    %c0 = arith.constant 0 : index
    %c0_0 = arith.constant 0 : index
    %0 = vector.load %arg1[%c0, %c0_0] : memref<128x16xf32, #tpu.memory_space<vmem>>, vector<128x16xf32>
    %1 = arith.truncf %0 : vector<128x16xf32> to vector<128x16xbf16>
    %c0_1 = arith.constant 0 : index
    %c0_2 = arith.constant 0 : index
    %2 = vector.load %arg2[%c0_1, %c0_2] : memref<16x64xbf16, #tpu.memory_space<vmem>>, vector<16x64xbf16>
    %cst = arith.constant dense<0.000000e+00> : vector<128x64xf32>
    %3 = tpu.matmul %1, %2, %cst {dimension_numbers = #tpu.dot_dimension_numbers<[1], [0], [0], [1], [0, 0, 1, 1], [], []>} : vector<128x16xbf16>, vector<16x64xbf16>, vector<128x64xf32> -> vector<128x64xf32>
    %4 = arith.truncf %3 : vector<128x64xf32> to vector<128x64xbf16>
    %c0_3 = arith.constant 0 : index
    %c0_4 = arith.constant 0 : index
    %5 = vector.load %arg5[%c0_3, %c0_4] : memref<128x64xbf16, #tpu.memory_space<vmem>>, vector<128x64xbf16>
    tpu.vector_store %arg5[%c0_3, %c0_4], %4 {strides = array<i32>} : memref<128x64xbf16, #tpu.memory_space<vmem>>, vector<128x64xbf16>,
    %c0_5 = arith.constant 0 : index
    %c0_6 = arith.constant 0 : index
    %6 = vector.load %arg3[%c0_5, %c0_6] : memref<4x64xbf16, #tpu.memory_space<vmem>>, vector<4x64xbf16>
    %cst_7 = arith.constant dense<0.000000e+00> : vector<4x128xf32>
    %7 = tpu.matmul %6, %4, %cst_7 {dimension_numbers = #tpu.dot_dimension_numbers<[1], [1], [0], [0], [0, 0, 1, 0], [], []>} : vector<4x64xbf16>, vector<128x64xbf16>, vector<4x128xf32> -> vector<4x128xf32>
    %c0_8 = arith.constant 0 : index
    %c0_9 = arith.constant 0 : index
    %8 = vector.load %arg6[%c0_8, %c0_9] : memref<4x128xf32, #tpu.memory_space<vmem>>, vector<4x128xf32>
    tpu.vector_store %arg6[%c0_8, %c0_9], %7 {strides = array<i32>} : memref<4x128xf32, #tpu.memory_space<vmem>>, vector<4x128xf32>,
    %c0_10 = arith.constant 0 : index
    %c0_11 = arith.constant 0 : index
    %9 = vector.load %arg4[%c0_10, %c0_11] : memref<4x64xbf16, #tpu.memory_space<vmem>>, vector<4x64xbf16>
    %cst_12 = arith.constant dense<0.000000e+00> : vector<128x4xf32>
    %10 = tpu.matmul %4, %9, %cst_12 {dimension_numbers = #tpu.dot_dimension_numbers<[1], [1], [0], [0], [0, 0, 1, 0], [], []>} : vector<128x64xbf16>, vector<4x64xbf16>, vector<128x4xf32> -> vector<128x4xf32>
    %c0_13 = arith.constant 0 : index
    %c0_14 = arith.constant 0 : index
    %11 = vector.load %arg7[%c0_13, %c0_14] : memref<128x4xf32, #tpu.memory_space<vmem>>, vector<128x4xf32>
    tpu.vector_store %arg7[%c0_13, %c0_14], %10 {strides = array<i32>} : memref<128x4xf32, #tpu.memory_space<vmem>>, vector<128x4xf32>,
    return
  }
  func.func @transform_0(%arg0: i32) -> (i32, i32) {
    %c0_i32 = arith.constant 0 : i32
    %c0_i32_0 = arith.constant 0 : i32
    return %arg0, %c0_i32 : i32, i32
  }
  func.func @transform_1(%arg0: i32) -> (i32, i32) {
    %c0_i32 = arith.constant 0 : i32
    %c0_i32_0 = arith.constant 0 : i32
    %c0_i32_1 = arith.constant 0 : i32
    return %c0_i32, %c0_i32_0 : i32, i32
  }
  func.func @transform_2(%arg0: i32) -> (i32, i32) {
    %c0_i32 = arith.constant 0 : i32
    %c0_i32_0 = arith.constant 0 : i32
    %c0_i32_1 = arith.constant 0 : i32
    return %c0_i32, %c0_i32_0 : i32, i32
  }
  func.func @transform_3(%arg0: i32) -> (i32, i32) {
    %c0_i32 = arith.constant 0 : i32
    %c0_i32_0 = arith.constant 0 : i32
    %c0_i32_1 = arith.constant 0 : i32
    return %c0_i32, %c0_i32_0 : i32, i32
  }
  func.func @transform_4(%arg0: i32) -> (i32, i32) {
    %c0_i32 = arith.constant 0 : i32
    %c0_i32_0 = arith.constant 0 : i32
    return %arg0, %c0_i32 : i32, i32
  }
  func.func @transform_5(%arg0: i32) -> (i32, i32) {
    %c0_i32 = arith.constant 0 : i32
    %c0_i32_0 = arith.constant 0 : i32
    return %c0_i32, %arg0 : i32, i32
  }
  func.func @transform_6(%arg0: i32) -> (i32, i32) {
    %c0_i32 = arith.constant 0 : i32
    %c0_i32_0 = arith.constant 0 : i32
    return %arg0, %c0_i32 : i32, i32
  }
}

</mosaic_0001>

<llo_original>
// kernel: tpu_custom_call.1
$region0: #{tpu_custom_call.1}
  #allocation0 [shape = 'u32[]', space=smem, size = 0x4, offset = 0x4, fixed_abs, tag = 'smem constant byte address 0x4 - core index']
  #allocation1 [shape = 'u32[144,128]{1,0:T(1,128)}', space=vmem, size = 0x12000, scoped, tag = 'internal scratch']
  %s0 = inlined_call_operand.vmem [shape: f32[256,16], index: 0, kind: input, shape index: {}]
  %s1 = inlined_call_operand.vmem [shape: bf16[16,64], index: 1, kind: input, shape index: {}]
  %s2 = inlined_call_operand.vmem [shape: bf16[4,64], index: 2, kind: input, shape index: {}]
  %s3 = inlined_call_operand.vmem [shape: bf16[4,64], index: 3, kind: input, shape index: {}]
  %s4 = inlined_call_operand.vmem [shape: bf16[256,64], index: 4, kind: output, shape index: {0}]
  %s5 = inlined_call_operand.hbm [shape: f32[4,256], index: 5, kind: output, shape index: {1}]
  %s6 = inlined_call_operand.vmem [shape: f32[256,4], index: 6, kind: output, shape index: {2}]
  %7 = xla_tuple %s4, %s5, %s6
  %s8 = sld [smem:[#allocation0]]
  $region65: #{tpu_custom_call.1} parent=0
    _
  %s10 = ssub.s32 1, %s8
  %s11 = scalar_select 0, %s10, %s8
  $region1: #{tpu_custom_call.1} parent=0
    #allocation2 [shape = 'u8[4096]{0}', space=vmem, size = 0x1000, scoped, tag = 'output window, operand 1']
    #allocation3 [shape = 's32[2]{0}', space=sflag, size = 0x8, scoped, tag = 'scoped memory for tpu_custom_call.1']
    %12 = vsyncpa [#allocation3], 0
    %s13 = scalar_lea.sflag [#allocation3], 1
    %14 = vsyncpa %s13, 0
    loop: start=0, step=1, limit=4
    $region2: #{tpu_custom_call.1} parent=1 // loop_pre_header
      _
    $region3: #{tpu_custom_call.1} parent=1 // loop_header
      %s16 = sphi 0, %s20
      %p17 = scmp.ge.s32.totalorder %s16, 4
      %s26 = sphi 0, %s28
      %s29 = sphi 0, %s26
      %s30 = sphi 0, %s29
      %s46 = sphi 0, %s30
      %s50 = sphi 0, %s50
      %s52 = sphi 0, %s50
      %s53 = sphi 0, %s52
      %s67 = sphi 0, %s53
      %s71 = sphi 0, %s71
      %s73 = sphi 0, %s71
      %s74 = sphi 0, %s73
      %s88 = sphi 0, %s74
      %s92 = sphi 0, %s92
      %s94 = sphi 0, %s92
      %s95 = sphi 0, %s94
      %s109 = sphi 0, %s95
      %s115 = sphi 0, %s117
      %s118 = sphi 0, %s115
      %s119 = sphi 0, %s118
      %s135 = sphi 0, %s119
      %s141 = sphi 0, %s143
      %s144 = sphi 0, %s141
      %s145 = sphi 0, %s144
      %s161 = sphi 0, %s145
      %s167 = sphi 0, %s169
      %s170 = sphi 0, %s167
      %s171 = sphi 0, %s170
      %s187 = sphi 0, %s171
    $region4: #{tpu_custom_call.1} parent=1 // loop_header_branch
      %19 = sbr.rel (%p17) target = $region8
    $region5: #{tpu_custom_call.1} parent=1 // loop_body
      %s21 = ssub.s32 %s16, 1
      %s22 = ssub.s32 %s16, 2
      %s23 = sadd.s32 %s16, 1
      %s24 = ssub.s32 %s16, %s23
      %p25 = scmp.eq.s32.totalorder %s24, 0
      %s27 = sadd.s32 %s26, 1
      %s28 = scalar_select %p25, %s26, %s27
      %p31 = pneg %p25
      %p32 = scmp.eq.s32.totalorder %s16, 1
      %p33 = por %p31, %p32
      %p34 = scmp.ne.s32.totalorder %s26, %s29
      %p35 = scmp.eq.s32.totalorder %s16, 0
      %p36 = por %p34, %p35
      %p37 = scmp.ne.s32.totalorder %s26, %s29
      %p38 = scmp.eq.s32.totalorder %s21, 1
      %p39 = por %p37, %p38
      %p40 = scmp.ne.s32.totalorder %s29, %s30
      %p41 = scmp.eq.s32.totalorder %s21, 0
      %p42 = por %p40, %p41
      %p43 = scmp.ne.s32.totalorder %s29, %s30
      %p44 = scmp.eq.s32.totalorder %s22, 1
      %p45 = por %p43, %p44
      %p47 = scmp.ne.s32.totalorder %s30, %s46
      %p48 = scmp.eq.s32.totalorder %s22, 0
      %p49 = por %p47, %p48
      %s51 = sadd.s32 %s50, 1
      %p54 = scmp.eq.s32.totalorder %s16, 1
      %p55 = scmp.ne.s32.totalorder %s50, %s52
      %p56 = scmp.eq.s32.totalorder %s16, 0
      %p57 = por %p55, %p56
      %p58 = scmp.ne.s32.totalorder %s50, %s52
      %p59 = scmp.eq.s32.totalorder %s21, 1
      %p60 = por %p58, %p59
      %p61 = scmp.ne.s32.totalorder %s52, %s53
      %p62 = scmp.eq.s32.totalorder %s21, 0
      %p63 = por %p61, %p62
      %p64 = scmp.ne.s32.totalorder %s52, %s53
      %p65 = scmp.eq.s32.totalorder %s22, 1
      %p66 = por %p64, %p65
      %p68 = scmp.ne.s32.totalorder %s53, %s67
      %p69 = scmp.eq.s32.totalorder %s22, 0
      %p70 = por %p68, %p69
      %s72 = sadd.s32 %s71, 1
      %p75 = scmp.eq.s32.totalorder %s16, 1
      %p76 = scmp.ne.s32.totalorder %s71, %s73
      %p77 = scmp.eq.s32.totalorder %s16, 0
      %p78 = por %p76, %p77
      %p79 = scmp.ne.s32.totalorder %s71, %s73
      %p80 = scmp.eq.s32.totalorder %s21, 1
      %p81 = por %p79, %p80
      %p82 = scmp.ne.s32.totalorder %s73, %s74
      %p83 = scmp.eq.s32.totalorder %s21, 0
      %p84 = por %p82, %p83
      %p85 = scmp.ne.s32.totalorder %s73, %s74
      %p86 = scmp.eq.s32.totalorder %s22, 1
      %p87 = por %p85, %p86
      %p89 = scmp.ne.s32.totalorder %s74, %s88
      %p90 = scmp.eq.s32.totalorder %s22, 0
      %p91 = por %p89, %p90
      %s93 = sadd.s32 %s92, 1
      %p96 = scmp.eq.s32.totalorder %s16, 1
      %p97 = scmp.ne.s32.totalorder %s92, %s94
      %p98 = scmp.eq.s32.totalorder %s16, 0
      %p99 = por %p97, %p98
      %p100 = scmp.ne.s32.totalorder %s92, %s94
      %p101 = scmp.eq.s32.totalorder %s21, 1
      %p102 = por %p100, %p101
      %p103 = scmp.ne.s32.totalorder %s94, %s95
      %p104 = scmp.eq.s32.totalorder %s21, 0
      %p105 = por %p103, %p104
      %p106 = scmp.ne.s32.totalorder %s94, %s95
      %p107 = scmp.eq.s32.totalorder %s22, 1
      %p108 = por %p106, %p107
      %p110 = scmp.ne.s32.totalorder %s95, %s109
      %p111 = scmp.eq.s32.totalorder %s22, 0
      %p112 = por %p110, %p111
      %s113 = ssub.s32 %s16, %s23
      %p114 = scmp.eq.s32.totalorder %s113, 0
      %s116 = sadd.s32 %s115, 1
      %s117 = scalar_select %p114, %s115, %s116
      %p120 = pneg %p114
      %p121 = scmp.eq.s32.totalorder %s16, 1
      %p122 = por %p120, %p121
      %p123 = scmp.ne.s32.totalorder %s115, %s118
      %p124 = scmp.eq.s32.totalorder %s16, 0
      %p125 = por %p123, %p124
      %p126 = scmp.ne.s32.totalorder %s115, %s118
      %p127 = scmp.eq.s32.totalorder %s21, 1
      %p128 = por %p126, %p127
      %p129 = scmp.ne.s32.totalorder %s118, %s119
      %p130 = scmp.eq.s32.totalorder %s21, 0
      %p131 = por %p129, %p130
      %p132 = scmp.ne.s32.totalorder %s118, %s119
      %p133 = scmp.eq.s32.totalorder %s22, 1
      %p134 = por %p132, %p133
      %p136 = scmp.ne.s32.totalorder %s119, %s135
      %p137 = scmp.eq.s32.totalorder %s22, 0
      %p138 = por %p136, %p137
      %s139 = ssub.s32 %s16, %s23
      %p140 = scmp.eq.s32.totalorder %s139, 0
      %s142 = sadd.s32 %s141, 1
      %s143 = scalar_select %p140, %s141, %s142
      %p146 = pneg %p140
      %p147 = scmp.eq.s32.totalorder %s16, 1
      %p148 = por %p146, %p147
      %p149 = scmp.ne.s32.totalorder %s141, %s144
      %p150 = scmp.eq.s32.totalorder %s16, 0
      %p151 = por %p149, %p150
      %p152 = scmp.ne.s32.totalorder %s141, %s144
      %p153 = scmp.eq.s32.totalorder %s21, 1
      %p154 = por %p152, %p153
      %p155 = scmp.ne.s32.totalorder %s144, %s145
      %p156 = scmp.eq.s32.totalorder %s21, 0
      %p157 = por %p155, %p156
      %p158 = scmp.ne.s32.totalorder %s144, %s145
      %p159 = scmp.eq.s32.totalorder %s22, 1
      %p160 = por %p158, %p159
      %p162 = scmp.ne.s32.totalorder %s145, %s161
      %p163 = scmp.eq.s32.totalorder %s22, 0
      %p164 = por %p162, %p163
      %s165 = ssub.s32 %s16, %s23
      %p166 = scmp.eq.s32.totalorder %s165, 0
      %s168 = sadd.s32 %s167, 1
      %s169 = scalar_select %p166, %s167, %s168
      %p172 = pneg %p166
      %p173 = scmp.eq.s32.totalorder %s16, 1
      %p174 = por %p172, %p173
      %p175 = scmp.ne.s32.totalorder %s167, %s170
      %p176 = scmp.eq.s32.totalorder %s16, 0
      %p177 = por %p175, %p176
      %p178 = scmp.ne.s32.totalorder %s167, %s170
      %p179 = scmp.eq.s32.totalorder %s21, 1
      %p180 = por %p178, %p179
      %p181 = scmp.ne.s32.totalorder %s170, %s171
      %p182 = scmp.eq.s32.totalorder %s21, 0
      %p183 = por %p181, %p182
      %p184 = scmp.ne.s32.totalorder %s170, %s171
      %p185 = scmp.eq.s32.totalorder %s22, 1
      %p186 = por %p184, %p185
      %p188 = scmp.ne.s32.totalorder %s171, %s187
      %p189 = scmp.eq.s32.totalorder %s22, 0
      %p190 = por %p188, %p189
      %p191 = scmp.le.s32.totalorder 1, %s16
      %p192 = scmp.lt.s32.totalorder %s16, 3
      %p193 = pnand %p191, %p192
      %p194 = pneg %p193
      // Predicated region
      $region9: #{tpu_custom_call.1} parent=5 // pred_check
        _
      $region10: #{tpu_custom_call.1} parent=5 // pred_check_branch
        %196 = sbr.rel (%p193) target = $region12
      $region11: #{tpu_custom_call.1} parent=5 // pred_region
        %s197 = ssub.s32 %s16, 1
        // Predicated region
        $region13: #{tpu_custom_call.1} parent=11 // pred_check
          %p198 = pneg %p63
        $region14: #{tpu_custom_call.1} parent=11 // pred_check_branch
          %200 = sbr.rel (%p198) target = $region16
        $region15: #{tpu_custom_call.1} parent=11 // pred_region
          _
        $region16: #{tpu_custom_call.1} parent=11 // pred_fallthru
          _
        // Predicated region
        $region17: #{tpu_custom_call.1} parent=11 // pred_check
          %p201 = pneg %p84
        $region18: #{tpu_custom_call.1} parent=11 // pred_check_branch
          %203 = sbr.rel (%p201) target = $region20
        $region19: #{tpu_custom_call.1} parent=11 // pred_region
          _
        $region20: #{tpu_custom_call.1} parent=11 // pred_fallthru
          _
        // Predicated region
        $region21: #{tpu_custom_call.1} parent=11 // pred_check
          %p204 = pneg %p105
        $region22: #{tpu_custom_call.1} parent=11 // pred_check_branch
          %206 = sbr.rel (%p204) target = $region24
        $region23: #{tpu_custom_call.1} parent=11 // pred_region
          _
        $region24: #{tpu_custom_call.1} parent=11 // pred_fallthru
          _
      $region12: #{tpu_custom_call.1} parent=5 // pred_fallthru
        _
      %p207 = scmp.lt.s32.totalorder %s16, 2
      // Predicated region
      $region25: #{tpu_custom_call.1} parent=5 // pred_check
        %p208 = pneg %p207
      $region26: #{tpu_custom_call.1} parent=5 // pred_check_branch
        %210 = sbr.rel (%p208) target = $region28
      $region27: #{tpu_custom_call.1} parent=5 // pred_region
        // Predicated region
        $region29: #{tpu_custom_call.1} parent=27 // pred_check
          %p211 = pneg %p36
        $region30: #{tpu_custom_call.1} parent=27 // pred_check_branch
          %213 = sbr.rel (%p211) target = $region32
        $region31: #{tpu_custom_call.1} parent=27 // pred_region
          %s214 = smul.u32 16, %s16
          %p215 = scmp.lt.s32.totalorder %s214, 31
          %s216 = scalar_select %p215, %s214, 31
          %s217 = smul.addr %s216, 8
          %s218 = scalar_lea.vmem %s0, %s217
          %s219 = smul.u32 16, %s16
        $region32: #{tpu_custom_call.1} parent=27 // pred_fallthru
          _
      $region28: #{tpu_custom_call.1} parent=5 // pred_fallthru
        _
      %p220 = scmp.le.s32.totalorder 1, %s16
      %p221 = scmp.lt.s32.totalorder %s16, 3
      %p222 = pnand %p220, %p221
      %p223 = pneg %p222
      // Predicated region
      $region33: #{tpu_custom_call.1} parent=5 // pred_check
        _
      $region34: #{tpu_custom_call.1} parent=5 // pred_check_branch
        %225 = sbr.rel (%p222) target = $region36
      $region35: #{tpu_custom_call.1} parent=5 // pred_region
        %s226 = ssub.s32 %s16, 1
        %s227 = smul.u32 16, %s21
        %p228 = scmp.lt.s32.totalorder %s227, 31
        %s229 = scalar_select %p228, %s227, 31
        %s230 = smul.addr %s229, 8
        %s231 = scalar_lea.vmem %s0, %s230
        %p232 = pneg %p42
        %p233 = pneg %p39
        %p234 = pneg %p63
        %p235 = pneg %p60
        %p236 = pneg %p84
        %p237 = pneg %p81
        %p238 = pneg %p105
        %p239 = pneg %p102
        %p240 = pneg %p131
        %p241 = pneg %p128
        %s242 = smul.u32 16, %s21
        %p243 = scmp.lt.s32.totalorder %s242, 31
        %s244 = scalar_select %p243, %s242, 31
        %s245 = smul.addr %s244, 4
        %s246 = scalar_lea.vmem %s4, %s245
        %p247 = pneg %p157
        %p248 = pneg %p154
        %s249 = sand.u32 %s144, 1
        %s250 = scalar_lea.sflag [#allocation3], %s249
        %s251 = sand.u32 %s144, 1
        %s252 = smul.addr %s251, 4
        %s253 = scalar_lea.vmem [#allocation2], %s252
        %p254 = pneg %p183
        %p255 = pneg %p180
        %s256 = smul.u32 16, %s21
        %p257 = scmp.lt.s32.totalorder %s256, 31
        %s258 = scalar_select %p257, %s256, 31
        %s259 = smul.addr %s258, 8
        %s260 = scalar_lea.vmem %s6, %s259
        %s261 = smul.u32 16, %s21
        %p262 = scmp.lt.s32.totalorder %s261, 31
        %s263 = scalar_select %p262, %s261, 31
        %s264 = smul.addr %s263, 8
        %s265 = scalar_lea.vmem %s0, %s264
        %s266 = smul.u32 16, %s21
        %s267 = smul.u32 16, %s21
        %p268 = scmp.lt.s32.totalorder %s267, 31
        %s269 = scalar_select %p268, %s267, 31
        %s270 = smul.addr %s269, 4
        %s271 = scalar_lea.vmem %s4, %s270
        %s272 = smul.u32 16, %s21
        %s273 = smul.u32 16, %s21
        %p274 = scmp.lt.s32.totalorder %s273, 31
        %s275 = scalar_select %p274, %s273, 31
        %s276 = smul.addr %s275, 8
        %s277 = scalar_lea.vmem %s6, %s276
        %s278 = smul.u32 16, %s21
        %v280 = vld [vmem:[%s265] sm:$0xff]
        %v281 = vld [vmem:[%s265 + $0x8] sm:$0xff]
        %v282 = vld [vmem:[%s265 + $0x10] sm:$0xff]
        %v283 = vld [vmem:[%s265 + $0x18] sm:$0xff]
        %v284 = vld [vmem:[%s265 + $0x20] sm:$0xff]
        %v285 = vld [vmem:[%s265 + $0x28] sm:$0xff]
        %v286 = vld [vmem:[%s265 + $0x30] sm:$0xff]
        %v287 = vld [vmem:[%s265 + $0x38] sm:$0xff]
        %v288 = vld [vmem:[%s265 + $0x40] sm:$0xff]
        %v289 = vld [vmem:[%s265 + $0x48] sm:$0xff]
        %v290 = vld [vmem:[%s265 + $0x50] sm:$0xff]
        %v291 = vld [vmem:[%s265 + $0x58] sm:$0xff]
        %v292 = vld [vmem:[%s265 + $0x60] sm:$0xff]
        %v293 = vld [vmem:[%s265 + $0x68] sm:$0xff]
        %v294 = vld [vmem:[%s265 + $0x70] sm:$0xff]
        %v295 = vld [vmem:[%s265 + $0x78] sm:$0xff]
        %v296 = vpack.c.bf16 %v281, %v280
        %v297 = vpack.c.bf16 %v283, %v282
        %v298 = vpack.c.bf16 %v285, %v284
        %v299 = vpack.c.bf16 %v287, %v286
        %v300 = vpack.c.bf16 %v289, %v288
        %v301 = vpack.c.bf16 %v291, %v290
        %v302 = vpack.c.bf16 %v293, %v292
        %v303 = vpack.c.bf16 %v295, %v294
        %v304 = vld [vmem:[%s1] sm:$0xf]
        %v305 = vld [vmem:[%s1 + $0x4] sm:$0xf]
        %v308 = vunpack.c.l.b16 %v304
        %v309 = vunpack.c.l.b16 %v305
        %v310 = vpack.c.b16 %v309, %v308
        %vm312 = vcmask 130048
        %v314 = vsel %vm312, %v296, 0
        %v317 = vsel %vm312, %v297, 0
        %v320 = vsel %vm312, %v298, 0
        %v323 = vsel %vm312, %v299, 0
        %v326 = vsel %vm312, %v300, 0
        %v329 = vsel %vm312, %v301, 0
        %v332 = vsel %vm312, %v302, 0
        %v335 = vsel %vm312, %v303, 0
        %337 = vmatprep.subr.bf16.mxu0 0
        %338 = vmatpush1.bf16.msra.mxu0 0
        %339 = vmatprep.subr.bf16.mxu0 0
        %340 = vmatpush1.bf16.msra.mxu0 0
        %341 = vmatprep.subr.bf16.mxu0 0
        %342 = vmatpush1.bf16.msra.mxu0 0
        %343 = vmatprep.subr.bf16.mxu0 0
        %344 = vmatpush1.bf16.msra.mxu0 0
        %345 = vmatprep.subr.bf16.mxu0 0
        %346 = vmatpush1.bf16.msra.mxu0 0
        %347 = vmatprep.subr.bf16.mxu0 0
        %348 = vmatpush1.bf16.msra.mxu0 0
        %349 = vmatprep.subr.bf16.mxu0 0
        %350 = vmatpush1.bf16.msra.mxu0 0
        %351 = vmatprep.subr.bf16.mxu0 0
        %352 = vmatpush1.bf16.msra.mxu0 %v310
        %353 = vmatprep.subr.bf16.mxu0 0
        %354 = vmatpush2.bf16.msra.mxu0 0
        %355 = vmatprep.subr.bf16.mxu0 0
        %356 = vmatpush2.bf16.msra.mxu0 0
        %357 = vmatprep.subr.bf16.mxu0 0
        %358 = vmatpush2.bf16.msra.mxu0 0
        %359 = vmatprep.subr.bf16.mxu0 0
        %360 = vmatpush2.bf16.msra.mxu0 0
        %361 = vmatprep.subr.bf16.mxu0 0
        %362 = vmatpush2.bf16.msra.mxu0 0
        %363 = vmatprep.subr.bf16.mxu0 0
        %364 = vmatpush2.bf16.msra.mxu0 0
        %365 = vmatprep.subr.bf16.mxu0 0
        %366 = vmatpush2.bf16.msra.mxu0 0
        %367 = vmatprep.subr.bf16.mxu0 0
        %368 = vmatpush2.bf16.msra.mxu0 0
        %369 = vmatprep.mubr.bf16.mxu0 0
        %370 = vmatmul.mubr.bf16.gmra.mxu0 %v314
        %v371 = vpop.f32.mrf.mxu0
        %v372 = vadd.f32 0.0, %v371
        %v373 = vpop.f32.mrf.mxu0
        %v374 = vpop.f32.mrf.mxu0
        %v375 = vadd.f32 0.0, %v374
        %v376 = vpop.f32.mrf.mxu0
        %377 = vmatprep.mubr.bf16.mxu0 0
        %378 = vmatmul.mubr.bf16.gmra.mxu0 %v317
        %v379 = vpop.f32.mrf.mxu0
        %v380 = vadd.f32 0.0, %v379
        %v381 = vpop.f32.mrf.mxu0
        %v382 = vpop.f32.mrf.mxu0
        %v383 = vadd.f32 0.0, %v382
        %v384 = vpop.f32.mrf.mxu0
        %385 = vmatprep.mubr.bf16.mxu0 0
        %386 = vmatmul.mubr.bf16.gmra.mxu0 %v320
        %v387 = vpop.f32.mrf.mxu0
        %v388 = vadd.f32 0.0, %v387
        %v389 = vpop.f32.mrf.mxu0
        %v390 = vpop.f32.mrf.mxu0
        %v391 = vadd.f32 0.0, %v390
        %v392 = vpop.f32.mrf.mxu0
        %393 = vmatprep.mubr.bf16.mxu0 0
        %394 = vmatmul.mubr.bf16.gmra.mxu0 %v323
        %v395 = vpop.f32.mrf.mxu0
        %v396 = vadd.f32 0.0, %v395
        %v397 = vpop.f32.mrf.mxu0
        %v398 = vpop.f32.mrf.mxu0
        %v399 = vadd.f32 0.0, %v398
        %v400 = vpop.f32.mrf.mxu0
        %401 = vmatprep.mubr.bf16.mxu0 0
        %402 = vmatmul.mubr.bf16.gmra.mxu0 %v326
        %v403 = vpop.f32.mrf.mxu0
        %v404 = vadd.f32 0.0, %v403
        %v405 = vpop.f32.mrf.mxu0
        %v406 = vpop.f32.mrf.mxu0
        %v407 = vadd.f32 0.0, %v406
        %v408 = vpop.f32.mrf.mxu0
        %409 = vmatprep.mubr.bf16.mxu0 0
        %410 = vmatmul.mubr.bf16.gmra.mxu0 %v329
        %v411 = vpop.f32.mrf.mxu0
        %v412 = vadd.f32 0.0, %v411
        %v413 = vpop.f32.mrf.mxu0
        %v414 = vpop.f32.mrf.mxu0
        %v415 = vadd.f32 0.0, %v414
        %v416 = vpop.f32.mrf.mxu0
        %417 = vmatprep.mubr.bf16.mxu0 0
        %418 = vmatmul.mubr.bf16.gmra.mxu0 %v332
        %v419 = vpop.f32.mrf.mxu0
        %v420 = vadd.f32 0.0, %v419
        %v421 = vpop.f32.mrf.mxu0
        %v422 = vpop.f32.mrf.mxu0
        %v423 = vadd.f32 0.0, %v422
        %v424 = vpop.f32.mrf.mxu0
        %425 = vmatprep.mubr.bf16.mxu0 0
        %426 = vmatmul.mubr.bf16.gmra.mxu0 %v335
        %v427 = vpop.f32.mrf.mxu0
        %v428 = vadd.f32 0.0, %v427
        %v429 = vpop.f32.mrf.mxu0
        %v430 = vpop.f32.mrf.mxu0
        %v431 = vadd.f32 0.0, %v430
        %v432 = vpop.f32.mrf.mxu0
        %433 = vdwg.mxu0
        %v434 = vpack.c.bf16 %v375, %v372
        %v435 = vpack.c.bf16 %v383, %v380
        %v436 = vpack.c.bf16 %v391, %v388
        %v437 = vpack.c.bf16 %v399, %v396
        %v438 = vpack.c.bf16 %v407, %v404
        %v439 = vpack.c.bf16 %v415, %v412
        %v440 = vpack.c.bf16 %v423, %v420
        %v441 = vpack.c.bf16 %v431, %v428
        %v450 = vunpack.c.l.b16 %v434
        %v451 = vunpack.c.h.b16 %v434
        %v452 = vunpack.c.l.b16 %v435
        %v453 = vunpack.c.h.b16 %v435
        %v454 = vunpack.c.l.b16 %v436
        %v455 = vunpack.c.h.b16 %v436
        %v456 = vunpack.c.l.b16 %v437
        %v457 = vunpack.c.h.b16 %v437
        %v458 = vunpack.c.l.b16 %v438
        %v459 = vunpack.c.h.b16 %v438
        %v460 = vunpack.c.l.b16 %v439
        %v461 = vunpack.c.h.b16 %v439
        %v462 = vunpack.c.l.b16 %v440
        %v463 = vunpack.c.h.b16 %v440
        %v464 = vunpack.c.l.b16 %v441
        %v465 = vunpack.c.h.b16 %v441
        %v466 = vpack.c.b16 %v450, %v450
        %v467 = vpack.c.b16 %v451, %v451
        %v468 = vpack.c.b16 %v452, %v452
        %v469 = vpack.c.b16 %v453, %v453
        %v470 = vpack.c.b16 %v454, %v454
        %v471 = vpack.c.b16 %v455, %v455
        %v472 = vpack.c.b16 %v456, %v456
        %v473 = vpack.c.b16 %v457, %v457
        %v474 = vpack.c.b16 %v458, %v458
        %v475 = vpack.c.b16 %v459, %v459
        %v476 = vpack.c.b16 %v460, %v460
        %v477 = vpack.c.b16 %v461, %v461
        %v478 = vpack.c.b16 %v462, %v462
        %v479 = vpack.c.b16 %v463, %v463
        %v480 = vpack.c.b16 %v464, %v464
        %v481 = vpack.c.b16 %v465, %v465
        %vm498 = vcmask 519168
        %499 = vst.msk [vmem:[%s271] sm:$0xf] %vm498, %v466
        %500 = vst.msk [vmem:[%s271 + $0x4] sm:$0xf] %vm498, %v467
        %501 = vst.msk [vmem:[%s271 + $0x8] sm:$0xf] %vm498, %v468
        %502 = vst.msk [vmem:[%s271 + $0xc] sm:$0xf] %vm498, %v469
        %503 = vst.msk [vmem:[%s271 + $0x10] sm:$0xf] %vm498, %v470
        %504 = vst.msk [vmem:[%s271 + $0x14] sm:$0xf] %vm498, %v471
        %505 = vst.msk [vmem:[%s271 + $0x18] sm:$0xf] %vm498, %v472
        %506 = vst.msk [vmem:[%s271 + $0x1c] sm:$0xf] %vm498, %v473
        %507 = vst.msk [vmem:[%s271 + $0x20] sm:$0xf] %vm498, %v474
        %508 = vst.msk [vmem:[%s271 + $0x24] sm:$0xf] %vm498, %v475
        %509 = vst.msk [vmem:[%s271 + $0x28] sm:$0xf] %vm498, %v476
        %510 = vst.msk [vmem:[%s271 + $0x2c] sm:$0xf] %vm498, %v477
        %511 = vst.msk [vmem:[%s271 + $0x30] sm:$0xf] %vm498, %v478
        %512 = vst.msk [vmem:[%s271 + $0x34] sm:$0xf] %vm498, %v479
        %513 = vst.msk [vmem:[%s271 + $0x38] sm:$0xf] %vm498, %v480
        %514 = vst.msk [vmem:[%s271 + $0x3c] sm:$0xf] %vm498, %v481
        %v515 = vld [vmem:[%s2] sm:$0x3]
        %vm516 = vcmask 523264
        %v518 = vsel %vm516, %v515, 0
        %v521 = vsel %vm516, %v434, 0
        %v524 = vsel %vm516, %v435, 0
        %v527 = vsel %vm516, %v436, 0
        %v530 = vsel %vm516, %v437, 0
        %v533 = vsel %vm516, %v438, 0
        %v536 = vsel %vm516, %v439, 0
        %v539 = vsel %vm516, %v440, 0
        %v542 = vsel %vm516, %v441, 0
        %544 = vmatprep.subr.bf16.mxu0 0
        %545 = vmatpush1.bf16.xpose.msra.mxu0 %v542
        %546 = vmatprep.subr.bf16.mxu0 0
        %547 = vmatpush1.bf16.xpose.msra.mxu0 %v539
        %548 = vmatprep.subr.bf16.mxu0 0
        %549 = vmatpush1.bf16.xpose.msra.mxu0 %v536
        %550 = vmatprep.subr.bf16.mxu0 0
        %551 = vmatpush1.bf16.xpose.msra.mxu0 %v533
        %552 = vmatprep.subr.bf16.mxu0 0
        %553 = vmatpush1.bf16.xpose.msra.mxu0 %v530
        %554 = vmatprep.subr.bf16.mxu0 0
        %555 = vmatpush1.bf16.xpose.msra.mxu0 %v527
        %556 = vmatprep.subr.bf16.mxu0 0
        %557 = vmatpush1.bf16.xpose.msra.mxu0 %v524
        %558 = vmatprep.subr.bf16.mxu0 0
        %559 = vmatpush1.bf16.xpose.msra.mxu0 %v521
        %560 = vmatprep.subr.bf16.mxu0 0
        %561 = vmatpush2.bf16.xpose.msra.mxu0 0
        %562 = vmatprep.subr.bf16.mxu0 0
        %563 = vmatpush2.bf16.xpose.msra.mxu0 0
        %564 = vmatprep.subr.bf16.mxu0 0
        %565 = vmatpush2.bf16.xpose.msra.mxu0 0
        %566 = vmatprep.subr.bf16.mxu0 0
        %567 = vmatpush2.bf16.xpose.msra.mxu0 0
        %568 = vmatprep.subr.bf16.mxu0 0
        %569 = vmatpush2.bf16.xpose.msra.mxu0 0
        %570 = vmatprep.subr.bf16.mxu0 0
        %571 = vmatpush2.bf16.xpose.msra.mxu0 0
        %572 = vmatprep.subr.bf16.mxu0 0
        %573 = vmatpush2.bf16.xpose.msra.mxu0 0
        %574 = vmatprep.subr.bf16.mxu0 0
        %575 = vmatpush2.bf16.xpose.msra.mxu0 0
        %576 = vmatprep.mubr.bf16.mxu0 0
        %577 = vmatmul.mubr.bf16.gmra.mxu0 %v518
        %v578 = vpop.f32.mrf.mxu0
        %v579 = vadd.f32 0.0, %v578
        %v580 = vpop.f32.mrf.mxu0
        %v581 = vpop.f32.mrf.mxu0
        %v582 = vpop.f32.mrf.mxu0
        %583 = vdwg.mxu0
        %584 = vst [vmem:[%s253] sm:$0xf] %v579
        %v585 = vld [vmem:[%s3] sm:$0x3]
        %v587 = vsel %vm516, %v585, 0
        %589 = vmatprep.subr.bf16.mxu0 0
        %590 = vmatpush1.bf16.xpose.msra.mxu0 0
        %591 = vmatprep.subr.bf16.mxu0 0
        %592 = vmatpush1.bf16.xpose.msra.mxu0 0
        %593 = vmatprep.subr.bf16.mxu0 0
        %594 = vmatpush1.bf16.xpose.msra.mxu0 0
        %595 = vmatprep.subr.bf16.mxu0 0
        %596 = vmatpush1.bf16.xpose.msra.mxu0 0
        %597 = vmatprep.subr.bf16.mxu0 0
        %598 = vmatpush1.bf16.xpose.msra.mxu0 0
        %599 = vmatprep.subr.bf16.mxu0 0
        %600 = vmatpush1.bf16.xpose.msra.mxu0 0
        %601 = vmatprep.subr.bf16.mxu0 0
        %602 = vmatpush1.bf16.xpose.msra.mxu0 0
        %603 = vmatprep.subr.bf16.mxu0 0
        %604 = vmatpush1.bf16.xpose.msra.mxu0 %v587
        %605 = vmatprep.subr.bf16.mxu0 0
        %606 = vmatpush2.bf16.xpose.msra.mxu0 0
        %607 = vmatprep.subr.bf16.mxu0 0
        %608 = vmatpush2.bf16.xpose.msra.mxu0 0
        %609 = vmatprep.subr.bf16.mxu0 0
        %610 = vmatpush2.bf16.xpose.msra.mxu0 0
        %611 = vmatprep.subr.bf16.mxu0 0
        %612 = vmatpush2.bf16.xpose.msra.mxu0 0
        %613 = vmatprep.subr.bf16.mxu0 0
        %614 = vmatpush2.bf16.xpose.msra.mxu0 0
        %615 = vmatprep.subr.bf16.mxu0 0
        %616 = vmatpush2.bf16.xpose.msra.mxu0 0
        %617 = vmatprep.subr.bf16.mxu0 0
        %618 = vmatpush2.bf16.xpose.msra.mxu0 0
        %619 = vmatprep.subr.bf16.mxu0 0
        %620 = vmatpush2.bf16.xpose.msra.mxu0 0
        %621 = vmatprep.mubr.bf16.mxu0 0
        %622 = vmatmul.mubr.bf16.gmra.mxu0 %v521
        %v623 = vpop.f32.mrf.mxu0
        %v624 = vadd.f32 0.0, %v623
        %v625 = vpop.f32.mrf.mxu0
        %v626 = vpop.f32.mrf.mxu0
        %v627 = vadd.f32 0.0, %v626
        %v628 = vpop.f32.mrf.mxu0
        %629 = vmatprep.mubr.bf16.mxu0 0
        %630 = vmatmul.mubr.bf16.gmra.mxu0 %v524
        %v631 = vpop.f32.mrf.mxu0
        %v632 = vadd.f32 0.0, %v631
        %v633 = vpop.f32.mrf.mxu0
        %v634 = vpop.f32.mrf.mxu0
        %v635 = vadd.f32 0.0, %v634
        %v636 = vpop.f32.mrf.mxu0
        %637 = vmatprep.mubr.bf16.mxu0 0
        %638 = vmatmul.mubr.bf16.gmra.mxu0 %v527
        %v639 = vpop.f32.mrf.mxu0
        %v640 = vadd.f32 0.0, %v639
        %v641 = vpop.f32.mrf.mxu0
        %v642 = vpop.f32.mrf.mxu0
        %v643 = vadd.f32 0.0, %v642
        %v644 = vpop.f32.mrf.mxu0
        %645 = vmatprep.mubr.bf16.mxu0 0
        %646 = vmatmul.mubr.bf16.gmra.mxu0 %v530
        %v647 = vpop.f32.mrf.mxu0
        %v648 = vadd.f32 0.0, %v647
        %v649 = vpop.f32.mrf.mxu0
        %v650 = vpop.f32.mrf.mxu0
        %v651 = vadd.f32 0.0, %v650
        %v652 = vpop.f32.mrf.mxu0
        %653 = vmatprep.mubr.bf16.mxu0 0
        %654 = vmatmul.mubr.bf16.gmra.mxu0 %v533
        %v655 = vpop.f32.mrf.mxu0
        %v656 = vadd.f32 0.0, %v655
        %v657 = vpop.f32.mrf.mxu0
        %v658 = vpop.f32.mrf.mxu0
        %v659 = vadd.f32 0.0, %v658
        %v660 = vpop.f32.mrf.mxu0
        %661 = vmatprep.mubr.bf16.mxu0 0
        %662 = vmatmul.mubr.bf16.gmra.mxu0 %v536
        %v663 = vpop.f32.mrf.mxu0
        %v664 = vadd.f32 0.0, %v663
        %v665 = vpop.f32.mrf.mxu0
        %v666 = vpop.f32.mrf.mxu0
        %v667 = vadd.f32 0.0, %v666
        %v668 = vpop.f32.mrf.mxu0
        %669 = vmatprep.mubr.bf16.mxu0 0
        %670 = vmatmul.mubr.bf16.gmra.mxu0 %v539
        %v671 = vpop.f32.mrf.mxu0
        %v672 = vadd.f32 0.0, %v671
        %v673 = vpop.f32.mrf.mxu0
        %v674 = vpop.f32.mrf.mxu0
        %v675 = vadd.f32 0.0, %v674
        %v676 = vpop.f32.mrf.mxu0
        %677 = vmatprep.mubr.bf16.mxu0 0
        %678 = vmatmul.mubr.bf16.gmra.mxu0 %v542
        %v679 = vpop.f32.mrf.mxu0
        %v680 = vadd.f32 0.0, %v679
        %v681 = vpop.f32.mrf.mxu0
        %v682 = vpop.f32.mrf.mxu0
        %v683 = vadd.f32 0.0, %v682
        %v684 = vpop.f32.mrf.mxu0
        %685 = vdwg.mxu0
        %vm686 = vcmask 31744
        %687 = vst.msk [vmem:[%s277] sm:$0xff] %vm686, %v624
        %688 = vst.msk [vmem:[%s277 + $0x8] sm:$0xff] %vm686, %v627
        %689 = vst.msk [vmem:[%s277 + $0x10] sm:$0xff] %vm686, %v632
        %690 = vst.msk [vmem:[%s277 + $0x18] sm:$0xff] %vm686, %v635
        %691 = vst.msk [vmem:[%s277 + $0x20] sm:$0xff] %vm686, %v640
        %692 = vst.msk [vmem:[%s277 + $0x28] sm:$0xff] %vm686, %v643
        %693 = vst.msk [vmem:[%s277 + $0x30] sm:$0xff] %vm686, %v648
        %694 = vst.msk [vmem:[%s277 + $0x38] sm:$0xff] %vm686, %v651
        %695 = vst.msk [vmem:[%s277 + $0x40] sm:$0xff] %vm686, %v656
        %696 = vst.msk [vmem:[%s277 + $0x48] sm:$0xff] %vm686, %v659
        %697 = vst.msk [vmem:[%s277 + $0x50] sm:$0xff] %vm686, %v664
        %698 = vst.msk [vmem:[%s277 + $0x58] sm:$0xff] %vm686, %v667
        %699 = vst.msk [vmem:[%s277 + $0x60] sm:$0xff] %vm686, %v672
        %700 = vst.msk [vmem:[%s277 + $0x68] sm:$0xff] %vm686, %v675
        %701 = vst.msk [vmem:[%s277 + $0x70] sm:$0xff] %vm686, %v680
        %702 = vst.msk [vmem:[%s277 + $0x78] sm:$0xff] %vm686, %v683
        %s703 = smul.u32 16, %s21
        %p704 = scmp.lt.s32.totalorder %s703, 31
        %s705 = scalar_select %p704, %s703, 31
        %s706 = smul.addr %s705, 4
        %s707 = scalar_lea.vmem %s4, %s706
        %s708 = sand.u32 %s144, 1
        %s709 = scalar_lea.sflag [#allocation3], %s708
        %s710 = sand.u32 %s144, 1
        %s711 = smul.addr %s710, 4
        %s712 = scalar_lea.vmem [#allocation2], %s711
        %s713 = smul.u32 16, %s21
        %p714 = scmp.lt.s32.totalorder %s713, 31
        %s715 = scalar_select %p714, %s713, 31
        %s716 = smul.addr %s715, 8
        %s717 = scalar_lea.vmem %s6, %s716
        // Predicated region
        $region37: #{tpu_custom_call.1} parent=35 // pred_check
          %p718 = pneg %p128
        $region38: #{tpu_custom_call.1} parent=35 // pred_check_branch
          %720 = sbr.rel (%p718) target = $region40
        $region39: #{tpu_custom_call.1} parent=35 // pred_region
          %s721 = smul.u32 16, %s21
        $region40: #{tpu_custom_call.1} parent=35 // pred_fallthru
          _
        // Predicated region
        $region41: #{tpu_custom_call.1} parent=35 // pred_check
          %p722 = pneg %p154
        $region42: #{tpu_custom_call.1} parent=35 // pred_check_branch
          %724 = sbr.rel (%p722) target = $region44
        $region43: #{tpu_custom_call.1} parent=35 // pred_region
          %s726 = ssub.s32 64, 64
          %727 = vsyncadd %s709, %s726
          %s728 = smul.addr %s21, 64
          %s729 = scalar_lea.hbm %s5, %s728
          %s731 = sshll.u32 %s712, 4
          %s732 = int_to_ptr.vmem [resolvable:$true] %s731
          %734 = dma.vmem_to_hbm [thread:$0]  %s732, 64, %s729, %s709
        $region44: #{tpu_custom_call.1} parent=35 // pred_fallthru
          _
        // Predicated region
        $region45: #{tpu_custom_call.1} parent=35 // pred_check
          %p735 = pneg %p180
        $region46: #{tpu_custom_call.1} parent=35 // pred_check_branch
          %737 = sbr.rel (%p735) target = $region48
        $region47: #{tpu_custom_call.1} parent=35 // pred_region
          %s738 = smul.u32 16, %s21
        $region48: #{tpu_custom_call.1} parent=35 // pred_fallthru
          _
      $region36: #{tpu_custom_call.1} parent=5 // pred_fallthru
        _
      %p739 = scmp.le.s32.totalorder 2, %s16
      // Predicated region
      $region49: #{tpu_custom_call.1} parent=5 // pred_check
        %p740 = pneg %p739
      $region50: #{tpu_custom_call.1} parent=5 // pred_check_branch
        %742 = sbr.rel (%p740) target = $region52
      $region51: #{tpu_custom_call.1} parent=5 // pred_region
        %s743 = ssub.s32 %s16, 2
        // Predicated region
        $region53: #{tpu_custom_call.1} parent=51 // pred_check
          %p744 = pneg %p134
        $region54: #{tpu_custom_call.1} parent=51 // pred_check_branch
          %746 = sbr.rel (%p744) target = $region56
        $region55: #{tpu_custom_call.1} parent=51 // pred_region
          %s747 = smul.u32 16, %s22
          %p748 = scmp.lt.s32.totalorder %s747, 31
          %s749 = scalar_select %p748, %s747, 31
          %s750 = smul.addr %s749, 4
          %s751 = scalar_lea.vmem %s4, %s750
        $region56: #{tpu_custom_call.1} parent=51 // pred_fallthru
          _
        // Predicated region
        $region57: #{tpu_custom_call.1} parent=51 // pred_check
          %p752 = pneg %p160
        $region58: #{tpu_custom_call.1} parent=51 // pred_check_branch
          %754 = sbr.rel (%p752) target = $region60
        $region59: #{tpu_custom_call.1} parent=51 // pred_region
          %s755 = sand.u32 %s145, 1
          %s756 = scalar_lea.sflag [#allocation3], %s755
          %s757 = sand.u32 %s145, 1
          %s758 = smul.addr %s757, 4
          %s759 = scalar_lea.vmem [#allocation2], %s758
          %760 = dma.done %s756, 64
        $region60: #{tpu_custom_call.1} parent=51 // pred_fallthru
          _
        // Predicated region
        $region61: #{tpu_custom_call.1} parent=51 // pred_check
          %p761 = pneg %p186
        $region62: #{tpu_custom_call.1} parent=51 // pred_check_branch
          %763 = sbr.rel (%p761) target = $region64
        $region63: #{tpu_custom_call.1} parent=51 // pred_region
          %s764 = smul.u32 16, %s22
          %p765 = scmp.lt.s32.totalorder %s764, 31
          %s766 = scalar_select %p765, %s764, 31
          %s767 = smul.addr %s766, 8
          %s768 = scalar_lea.vmem %s6, %s767
        $region64: #{tpu_custom_call.1} parent=51 // pred_fallthru
          _
      $region52: #{tpu_custom_call.1} parent=5 // pred_fallthru
        _
    $region6: #{tpu_custom_call.1} parent=1 // loop_footer
      %s20 = sadd.s32 1, %s16
    $region7: #{tpu_custom_call.1} parent=1 // loop_footer_branch
      %15 = sbr.rel target = $region3
    $region8: #{tpu_custom_call.1} parent=1 // loop_exit
      _
    %769 = vsyncpa [#allocation3], 1
    %s770 = scalar_lea.sflag [#allocation3], 1
    %771 = vsyncpa %s770, 1

</llo_original>
